<compile_context>
chip_gen: v7x
topology: tpu7x:2x2x1
jax: 0.10.0
libtpu: 0.0.40
codegen_flags: <defaults>
</compile_context>

<pallas_src>
import jax
import jax.numpy as jnp
from jax.experimental import pallas as pl
from jax.experimental.pallas import tpu as pltpu


def _round_up(n: int, m: int) -> int:
    return ((n + m - 1) // m) * m


def mlp_kernel(x_ref, w1_ref, b1_ref, w2_ref, b2_ref, out_ref):
    """One batch tile, batch-first (row-major) layout, all f32.

    x_ref : (tb, F)  f32  -- streamed per grid step
    w1_ref: (F, H)   f32  -- resident (transposed Linear weight)
    b1_ref: (1, H)   f32  -- resident
    w2_ref: (H, A)   f32  -- resident (transposed Linear weight)
    b2_ref: (1, A)   f32  -- resident
    out_ref:(tb, A)  f32  -- streamed output tile
    """
    # Layer 1: (tb,F) @ (F,H) with f32 accumulation on the MXU; bias + ReLU.
    h = jnp.dot(x_ref[...], w1_ref[...], preferred_element_type=jnp.float32)
    h = jnp.maximum(h + b1_ref[...], 0.0)
    # Layer 2: bias add fused straight into the output store.
    out_ref[...] = (
        jnp.dot(h, w2_ref[...], preferred_element_type=jnp.float32) + b2_ref[...]
    ).astype(out_ref.dtype)


def neural_network_forward(x, w1, b1, w2, b2, *,
                           block_b: int = 16384,
                           min_pallas_rows: int = 1024):
    """Forward pass of NeuralNetwork.

    x : (B, F) float32
    w1: (H, F), b1: (H,)   -- PyTorch Linear layout (out_features, in_features)
    w2: (A, H), b2: (A,)
    returns (B, A) float32

    block_b guidance: ~8-16k on v5e (16 MiB default scoped VMEM), ~16k on v6e,
    ~32k on v7x.  Even 32k-row f32 tiles double-buffered are < 10 MiB here.
    """
    B, F = x.shape
    H = w1.shape[0]
    A = w2.shape[0]

    x = x.astype(jnp.float32)
    # Tiny, one-time transposes so the kernel dots are plain (M,K)x(K,N).
    w1t = jnp.transpose(w1).astype(jnp.float32)   # (F, H)
    w2t = jnp.transpose(w2).astype(jnp.float32)   # (H, A)
    b1r = b1.reshape(1, H).astype(jnp.float32)
    b2r = b2.reshape(1, A).astype(jnp.float32)

    # Small-batch regime: a plain XLA fusion beats pallas_call overhead.
    if B < min_pallas_rows:
        h = jnp.maximum(
            jnp.dot(x, w1t, preferred_element_type=jnp.float32) + b1r, 0.0)
        return jnp.dot(h, w2t, preferred_element_type=jnp.float32) + b2r

    # Batch tile: multiple of 8 (sublane rule).  If the whole (large) batch
    # would fit a single tile, split it into two so both v7x TensorCores get
    # work under dimension_semantics=("parallel",).
    if B >= 4096 and _round_up(B, 8) <= block_b:
        tb = _round_up(pl.cdiv(B, 2), 8)
    else:
        tb = min(block_b, _round_up(B, 8))
    b_pad = _round_up(B, tb)
    grid = (b_pad // tb,)

    # Pad only when needed (costs one extra pass over x; pick block_b that
    # divides B to avoid it for large batches).
    xp = x if b_pad == B else jnp.pad(x, ((0, b_pad - B), (0, 0)))

    cost = pl.CostEstimate(
        flops=2 * b_pad * (F * H + H * A),
        transcendentals=0,
        bytes_accessed=(b_pad * F * 4                 # streamed x
                        + (F * H + H * A + H + A) * 4  # resident weights/biases
                        + b_pad * A * 4),              # streamed output
    )

    y = pl.pallas_call(
        mlp_kernel,
        out_shape=jax.ShapeDtypeStruct((b_pad, A), jnp.float32),
        grid=grid,
        in_specs=[
            pl.BlockSpec((tb, F), lambda i: (i, 0)),   # streamed x tile
            pl.BlockSpec((F, H), lambda i: (0, 0)),    # resident weights/biases
            pl.BlockSpec((1, H), lambda i: (0, 0)),
            pl.BlockSpec((H, A), lambda i: (0, 0)),
            pl.BlockSpec((1, A), lambda i: (0, 0)),
        ],
        out_specs=pl.BlockSpec((tb, A), lambda i: (i, 0)),
        compiler_params=pltpu.CompilerParams(
            dimension_semantics=("parallel",)),        # both TCs on v7x
        cost_estimate=cost,
    )(xp, w1t, b1r, w2t, b2r)

    # Drop padded rows (they hold ReLU(b1)->W2+b2 garbage, never returned).
    return y if b_pad == B else y[:B]


def init_params(key, feature_size, action_size, hidden_size=50):
    """Xavier-uniform weights (PyTorch (out, in) layout), biases = 0.01."""
    k1, k2 = jax.random.split(key)
    lim1 = (6.0 / (feature_size + hidden_size)) ** 0.5
    lim2 = (6.0 / (hidden_size + action_size)) ** 0.5
    w1 = jax.random.uniform(k1, (hidden_size, feature_size), jnp.float32,
                            minval=-lim1, maxval=lim1)
    w2 = jax.random.uniform(k2, (action_size, hidden_size), jnp.float32,
                            minval=-lim2, maxval=lim2)
    b1 = jnp.full((hidden_size,), 0.01, jnp.float32)
    b2 = jnp.full((action_size,), 0.01, jnp.float32)
    return w1, b1, w2, b2


def _reference(x, w1, b1, w2, b2):
    """Plain-JAX f32 reference (mirrors the PyTorch forward)."""
    h = jnp.maximum(
        jnp.dot(x, w1.T, preferred_element_type=jnp.float32) + b1[None, :], 0.0)
    return jnp.dot(h, w2.T, preferred_element_type=jnp.float32) + b2[None, :]


if __name__ == "__main__":
    key = jax.random.PRNGKey(0)
    kx1, kx2, kx3, kp = jax.random.split(key, 4)

    feature_size = 32
    action_size = 8
    w1, b1, w2, b2 = init_params(kp, feature_size, action_size)

    # 1) Small single-tile case, forced through the Pallas path (grid = 1).
    batch = 8
    x = jax.random.normal(kx1, (batch, feature_size), jnp.float32)
    out = jax.block_until_ready(
        neural_network_forward(x, w1, b1, w2, b2, min_pallas_rows=0))
    ref = _reference(x, w1, b1, w2, b2)
    assert out.shape == (batch, action_size)
    assert jnp.allclose(out, ref, atol=2e-2, rtol=2e-2), \
        float(jnp.max(jnp.abs(out - ref)))

    # 2) Multi-tile case: exercises the batch grid (3 steps) + padding path.
    batch2 = 300
    x2 = jax.random.normal(kx2, (batch2, feature_size), jnp.float32)
    out2 = jax.block_until_ready(
        neural_network_forward(x2, w1, b1, w2, b2,
                               block_b=128, min_pallas_rows=0))
    ref2 = _reference(x2, w1, b1, w2, b2)
    assert out2.shape == (batch2, action_size)
    assert jnp.allclose(out2, ref2, atol=2e-2, rtol=2e-2), \
        float(jnp.max(jnp.abs(out2 - ref2)))

    # 3) Tiny batch with defaults: takes the plain-XLA small-batch branch.
    batch3 = 5
    x3 = jax.random.normal(kx3, (batch3, feature_size), jnp.float32)
    out3 = jax.block_until_ready(neural_network_forward(x3, w1, b1, w2, b2))
    ref3 = _reference(x3, w1, b1, w2, b2)
    assert out3.shape == (batch3, action_size)
    assert jnp.allclose(out3, ref3, atol=2e-2, rtol=2e-2), \
        float(jnp.max(jnp.abs(out3 - ref3)))

    print("KERNEL_OK")
</pallas_src>

<mosaic_0001>
module attributes {stable_mosaic.version = 11 : i64} {
  func.func @mlp_kernel(%arg0: i32, %arg1: memref<8x32xf32, #tpu.memory_space<vmem>>, %arg2: memref<32x50xf32, #tpu.memory_space<vmem>>, %arg3: memref<1x50xf32, #tpu.memory_space<vmem>>, %arg4: memref<50x8xf32, #tpu.memory_space<vmem>>, %arg5: memref<1x8xf32, #tpu.memory_space<vmem>>, %arg6: memref<8x8xf32, #tpu.memory_space<vmem>>) attributes {dimension_semantics = [#tpu.dimension_semantics<parallel>], iteration_bounds = array<i64: 1>, scalar_prefetch = 0 : i64, scratch_operands = 0 : i64, tpu.core_type = #tpu.core_type<tc>, window_params = [{transform_indices = @transform_0, window_bounds = array<i64: 8, 32>}, {pipeline_mode = #tpu.pipeline_mode<synchronous>, transform_indices = @transform_1, window_bounds = array<i64: 32, 50>}, {pipeline_mode = #tpu.pipeline_mode<synchronous>, transform_indices = @transform_2, window_bounds = array<i64: 1, 50>}, {pipeline_mode = #tpu.pipeline_mode<synchronous>, transform_indices = @transform_3, window_bounds = array<i64: 50, 8>}, {pipeline_mode = #tpu.pipeline_mode<synchronous>, transform_indices = @transform_4, window_bounds = array<i64: 1, 8>}, {transform_indices = @transform_5, window_bounds = array<i64: 8, 8>}]} {
    %c0 = arith.constant 0 : index
    %c0_0 = arith.constant 0 : index
    %0 = vector.load %arg1[%c0, %c0_0] : memref<8x32xf32, #tpu.memory_space<vmem>>, vector<8x32xf32>
    %c0_1 = arith.constant 0 : index
    %c0_2 = arith.constant 0 : index
    %1 = vector.load %arg2[%c0_1, %c0_2] : memref<32x50xf32, #tpu.memory_space<vmem>>, vector<32x50xf32>
    %cst = arith.constant dense<0.000000e+00> : vector<8x50xf32>
    %2 = tpu.matmul %0, %1, %cst {dimension_numbers = #tpu.dot_dimension_numbers<[1], [0], [0], [1], [0, 0, 1, 1], [], []>} : vector<8x32xf32>, vector<32x50xf32>, vector<8x50xf32> -> vector<8x50xf32>
    %c0_3 = arith.constant 0 : index
    %c0_4 = arith.constant 0 : index
    %3 = vector.load %arg3[%c0_3, %c0_4] : memref<1x50xf32, #tpu.memory_space<vmem>>, vector<1x50xf32>
    %4 = vector.broadcast %3 : vector<1x50xf32> to vector<8x50xf32>
    %5 = arith.addf %2, %4 : vector<8x50xf32>
    %cst_5 = arith.constant 0.000000e+00 : f32
    %6 = vector.broadcast %cst_5 : f32 to vector<8x50xf32>
    %7 = arith.maximumf %5, %6 : vector<8x50xf32>
    %c0_6 = arith.constant 0 : index
    %c0_7 = arith.constant 0 : index
    %8 = vector.load %arg4[%c0_6, %c0_7] : memref<50x8xf32, #tpu.memory_space<vmem>>, vector<50x8xf32>
    %cst_8 = arith.constant dense<0.000000e+00> : vector<8x8xf32>
    %9 = tpu.matmul %7, %8, %cst_8 {dimension_numbers = #tpu.dot_dimension_numbers<[1], [0], [0], [1], [0, 0, 1, 1], [], []>} : vector<8x50xf32>, vector<50x8xf32>, vector<8x8xf32> -> vector<8x8xf32>
    %c0_9 = arith.constant 0 : index
    %c0_10 = arith.constant 0 : index
    %10 = vector.load %arg5[%c0_9, %c0_10] : memref<1x8xf32, #tpu.memory_space<vmem>>, vector<1x8xf32>
    %11 = vector.broadcast %10 : vector<1x8xf32> to vector<8x8xf32>
    %12 = arith.addf %9, %11 : vector<8x8xf32>
    %c0_11 = arith.constant 0 : index
    %c0_12 = arith.constant 0 : index
    %13 = vector.load %arg6[%c0_11, %c0_12] : memref<8x8xf32, #tpu.memory_space<vmem>>, vector<8x8xf32>
    tpu.vector_store %arg6[%c0_11, %c0_12], %12 {strides = array<i32>} : memref<8x8xf32, #tpu.memory_space<vmem>>, vector<8x8xf32>,
    return
  }
  func.func @transform_0(%arg0: i32) -> (i32, i32) {
    %c0_i32 = arith.constant 0 : i32
    %c0_i32_0 = arith.constant 0 : i32
    return %arg0, %c0_i32 : i32, i32
  }
  func.func @transform_1(%arg0: i32) -> (i32, i32) {
    %c0_i32 = arith.constant 0 : i32
    %c0_i32_0 = arith.constant 0 : i32
    %c0_i32_1 = arith.constant 0 : i32
    return %c0_i32, %c0_i32_0 : i32, i32
  }
  func.func @transform_2(%arg0: i32) -> (i32, i32) {
    %c0_i32 = arith.constant 0 : i32
    %c0_i32_0 = arith.constant 0 : i32
    %c0_i32_1 = arith.constant 0 : i32
    return %c0_i32, %c0_i32_0 : i32, i32
  }
  func.func @transform_3(%arg0: i32) -> (i32, i32) {
    %c0_i32 = arith.constant 0 : i32
    %c0_i32_0 = arith.constant 0 : i32
    %c0_i32_1 = arith.constant 0 : i32
    return %c0_i32, %c0_i32_0 : i32, i32
  }
  func.func @transform_4(%arg0: i32) -> (i32, i32) {
    %c0_i32 = arith.constant 0 : i32
    %c0_i32_0 = arith.constant 0 : i32
    %c0_i32_1 = arith.constant 0 : i32
    return %c0_i32, %c0_i32_0 : i32, i32
  }
  func.func @transform_5(%arg0: i32) -> (i32, i32) {
    %c0_i32 = arith.constant 0 : i32
    %c0_i32_0 = arith.constant 0 : i32
    return %arg0, %c0_i32 : i32, i32
  }
}

</mosaic_0001>

<llo_original>
// kernel: tpu_custom_call.1
$region0: #{tpu_custom_call.1}
  #allocation0 [shape = 'u32[]', space=smem, size = 0x4, offset = 0x4, fixed_abs, tag = 'smem constant byte address 0x4 - core index']
  #allocation1 [shape = 'u32[144,128]{1,0:T(1,128)}', space=vmem, size = 0x12000, scoped, tag = 'internal scratch']
  %s0 = inlined_call_operand.vmem [shape: f32[8,32], index: 0, kind: input, shape index: {}]
  %s1 = inlined_call_operand.vmem [shape: f32[32,50], index: 1, kind: input, shape index: {}]
  %s2 = inlined_call_operand.vmem [shape: f32[1,50], index: 2, kind: input, shape index: {}]
  %s3 = inlined_call_operand.vmem [shape: f32[50,8], index: 3, kind: input, shape index: {}]
  %s4 = inlined_call_operand.vmem [shape: f32[1,8], index: 4, kind: input, shape index: {}]
  %s5 = inlined_call_operand.hbm [shape: f32[8,8], index: 5, kind: output, shape index: {}]
  %s6 = sld [smem:[#allocation0]]
  $region30: #{tpu_custom_call.1} parent=0
    _
  %s8 = ssub.s32 1, %s6
  %s9 = scalar_select 0, %s8, %s6
  $region1: #{tpu_custom_call.1} parent=0
    #allocation2 [shape = 'u8[4096]{0}', space=vmem, size = 0x1000, scoped, tag = 'output window, operand 0, single buffered']
    #allocation3 [shape = 's32[1]{0}', space=sflag, size = 0x4, scoped, tag = 'scoped memory for tpu_custom_call.1']
    %10 = vsyncpa [#allocation3], 0
    // Predicated region
    $region2: #{tpu_custom_call.1} parent=1 // pred_check
      _
    $region3: #{tpu_custom_call.1} parent=1 // pred_check_branch
      %12 = sbr.rel (0) target = $region5
    $region4: #{tpu_custom_call.1} parent=1 // pred_region
      _
    $region5: #{tpu_custom_call.1} parent=1 // pred_fallthru
      _
    // Predicated region
    $region6: #{tpu_custom_call.1} parent=1 // pred_check
      _
    $region7: #{tpu_custom_call.1} parent=1 // pred_check_branch
      %14 = sbr.rel (0) target = $region9
    $region8: #{tpu_custom_call.1} parent=1 // pred_region
      _
    $region9: #{tpu_custom_call.1} parent=1 // pred_fallthru
      _
    // Predicated region
    $region10: #{tpu_custom_call.1} parent=1 // pred_check
      _
    $region11: #{tpu_custom_call.1} parent=1 // pred_check_branch
      %16 = sbr.rel (0) target = $region13
    $region12: #{tpu_custom_call.1} parent=1 // pred_region
      _
    $region13: #{tpu_custom_call.1} parent=1 // pred_fallthru
      _
    // Predicated region
    $region14: #{tpu_custom_call.1} parent=1 // pred_check
      _
    $region15: #{tpu_custom_call.1} parent=1 // pred_check_branch
      %18 = sbr.rel (0) target = $region17
    $region16: #{tpu_custom_call.1} parent=1 // pred_region
      _
    $region17: #{tpu_custom_call.1} parent=1 // pred_fallthru
      _
    // Predicated region
    $region18: #{tpu_custom_call.1} parent=1 // pred_check
      _
    $region19: #{tpu_custom_call.1} parent=1 // pred_check_branch
      %20 = sbr.rel (0) target = $region21
    $region20: #{tpu_custom_call.1} parent=1 // pred_region
      _
    $region21: #{tpu_custom_call.1} parent=1 // pred_fallthru
      _
    %v21 = vld [vmem:[%s0] sm:$0xff]
    %v22 = vld [vmem:[%s1] sm:$0xff]
    %v23 = vld [vmem:[%s1 + $0x8] sm:$0xff]
    %v24 = vld [vmem:[%s1 + $0x10] sm:$0xff]
    %v25 = vld [vmem:[%s1 + $0x18] sm:$0xff]
    %v26 = vld [vmem:[%s2] sm:$0x1]
    %v28 = vlaneseq
    %v29 = vshrl.u32 %v28, 7
    %v30 = vsub.s32 0, %v29
    %v31 = vrot.slane %v26, %v30
    %vm33 = vcmask 261120
    %v35 = vsel %vm33, %v21, 0
    %37 = vmatprep.subr.mxu0 0.0
    %38 = vmatpush1.msra.mxu0 %v22
    %39 = vmatprep.subr.mxu0 0.0
    %40 = vmatpush1.msra.mxu0 %v23
    %41 = vmatprep.subr.mxu0 0.0
    %42 = vmatpush1.msra.mxu0 %v24
    %43 = vmatprep.subr.mxu0 0.0
    %44 = vmatpush1.msra.mxu0 %v25
    %45 = vmatprep.subr.mxu0 0.0
    %46 = vmatpush1.msra.mxu0 0.0
    %47 = vmatprep.subr.mxu0 0.0
    %48 = vmatpush1.msra.mxu0 0.0
    %49 = vmatprep.subr.mxu0 0.0
    %50 = vmatpush1.msra.mxu0 0.0
    %51 = vmatprep.subr.mxu0 0.0
    %52 = vmatpush1.msra.mxu0 0.0
    %53 = vmatprep.subr.mxu0 0.0
    %54 = vmatpush1.msra.mxu0 0.0
    %55 = vmatprep.subr.mxu0 0.0
    %56 = vmatpush1.msra.mxu0 0.0
    %57 = vmatprep.subr.mxu0 0.0
    %58 = vmatpush1.msra.mxu0 0.0
    %59 = vmatprep.subr.mxu0 0.0
    %60 = vmatpush1.msra.mxu0 0.0
    %61 = vmatprep.subr.mxu0 0.0
    %62 = vmatpush1.msra.mxu0 0.0
    %63 = vmatprep.subr.mxu0 0.0
    %64 = vmatpush1.msra.mxu0 0.0
    %65 = vmatprep.subr.mxu0 0.0
    %66 = vmatpush1.msra.mxu0 0.0
    %67 = vmatprep.subr.mxu0 0.0
    %68 = vmatpush1.msra.mxu0 0.0
    %69 = vmatprep.subr.mxu0 0.0
    %70 = vmatpush1.msra.mxu0 0.0
    %71 = vmatprep.subr.mxu0 0.0
    %72 = vmatpush1.msra.mxu0 0.0
    %73 = vmatprep.subr.mxu0 0.0
    %74 = vmatpush1.msra.mxu0 0.0
    %75 = vmatprep.subr.mxu0 0.0
    %76 = vmatpush1.msra.mxu0 0.0
    %77 = vmatprep.subr.mxu0 0.0
    %78 = vmatpush1.msra.mxu0 0.0
    %79 = vmatprep.subr.mxu0 0.0
    %80 = vmatpush1.msra.mxu0 0.0
    %81 = vmatprep.subr.mxu0 0.0
    %82 = vmatpush1.msra.mxu0 0.0
    %83 = vmatprep.subr.mxu0 0.0
    %84 = vmatpush1.msra.mxu0 0.0
    %85 = vmatprep.subr.mxu0 0.0
    %86 = vmatpush1.msra.mxu0 0.0
    %87 = vmatprep.subr.mxu0 0.0
    %88 = vmatpush1.msra.mxu0 0.0
    %89 = vmatprep.subr.mxu0 0.0
    %90 = vmatpush1.msra.mxu0 0.0
    %91 = vmatprep.subr.mxu0 0.0
    %92 = vmatpush1.msra.mxu0 0.0
    %93 = vmatprep.subr.mxu0 0.0
    %94 = vmatpush1.msra.mxu0 0.0
    %95 = vmatprep.subr.mxu0 0.0
    %96 = vmatpush1.msra.mxu0 0.0
    %97 = vmatprep.subr.mxu0 0.0
    %98 = vmatpush1.msra.mxu0 0.0
    %99 = vmatprep.subr.mxu0 0.0
    %100 = vmatpush1.msra.mxu0 0.0
    %101 = vmatprep.mubr.f32.mxu0 0.0
    %102 = vmatmul.mubr.f32.gmra.mrb[0].mxu0 %v35
    %v103 = vpop.f32.mrb[0].mxu0
    %v104 = vadd.f32 %v31, %v103
    %v105 = vpop.f32.mrb[0].mxu0
    %106 = vdwg.mxu0
    %v107 = vmax.f32 %v104, 0.0
    %v108 = vld [vmem:[%s3] sm:$0xff]
    %v109 = vld [vmem:[%s3 + $0x8] sm:$0xff]
    %v110 = vld [vmem:[%s3 + $0x10] sm:$0xff]
    %v111 = vld [vmem:[%s3 + $0x18] sm:$0xff]
    %v112 = vld [vmem:[%s3 + $0x20] sm:$0xff]
    %v113 = vld [vmem:[%s3 + $0x28] sm:$0xff]
    %v114 = vld [vmem:[%s3 + $0x30] sm:$0x3]
    %v115 = vld [vmem:[%s4] sm:$0x1]
    %v117 = vlaneseq
    %v118 = vshrl.u32 %v117, 7
    %v119 = vsub.s32 0, %v118
    %v120 = vrot.slane %v115, %v119
    %vm122 = vcmask 408576
    %v124 = vsel %vm122, %v107, 0
    %vm126 = vcmask 1041408
    %v128 = vsel %vm126, %v114, 0
    %130 = vmatprep.subr.mxu0 0.0
    %131 = vmatpush1.msra.mxu0 %v108
    %132 = vmatprep.subr.mxu0 0.0
    %133 = vmatpush1.msra.mxu0 %v109
    %134 = vmatprep.subr.mxu0 0.0
    %135 = vmatpush1.msra.mxu0 %v110
    %136 = vmatprep.subr.mxu0 0.0
    %137 = vmatpush1.msra.mxu0 %v111
    %138 = vmatprep.subr.mxu0 0.0
    %139 = vmatpush1.msra.mxu0 %v112
    %140 = vmatprep.subr.mxu0 0.0
    %141 = vmatpush1.msra.mxu0 %v113
    %142 = vmatprep.subr.mxu0 0.0
    %143 = vmatpush1.msra.mxu0 %v128
    %144 = vmatprep.subr.mxu0 0.0
    %145 = vmatpush1.msra.mxu0 0.0
    %146 = vmatprep.subr.mxu0 0.0
    %147 = vmatpush1.msra.mxu0 0.0
    %148 = vmatprep.subr.mxu0 0.0
    %149 = vmatpush1.msra.mxu0 0.0
    %150 = vmatprep.subr.mxu0 0.0
    %151 = vmatpush1.msra.mxu0 0.0
    %152 = vmatprep.subr.mxu0 0.0
    %153 = vmatpush1.msra.mxu0 0.0
    %154 = vmatprep.subr.mxu0 0.0
    %155 = vmatpush1.msra.mxu0 0.0
    %156 = vmatprep.subr.mxu0 0.0
    %157 = vmatpush1.msra.mxu0 0.0
    %158 = vmatprep.subr.mxu0 0.0
    %159 = vmatpush1.msra.mxu0 0.0
    %160 = vmatprep.subr.mxu0 0.0
    %161 = vmatpush1.msra.mxu0 0.0
    %162 = vmatprep.subr.mxu0 0.0
    %163 = vmatpush1.msra.mxu0 0.0
    %164 = vmatprep.subr.mxu0 0.0
    %165 = vmatpush1.msra.mxu0 0.0
    %166 = vmatprep.subr.mxu0 0.0
    %167 = vmatpush1.msra.mxu0 0.0
    %168 = vmatprep.subr.mxu0 0.0
    %169 = vmatpush1.msra.mxu0 0.0
    %170 = vmatprep.subr.mxu0 0.0
    %171 = vmatpush1.msra.mxu0 0.0
    %172 = vmatprep.subr.mxu0 0.0
    %173 = vmatpush1.msra.mxu0 0.0
    %174 = vmatprep.subr.mxu0 0.0
    %175 = vmatpush1.msra.mxu0 0.0
    %176 = vmatprep.subr.mxu0 0.0
    %177 = vmatpush1.msra.mxu0 0.0
    %178 = vmatprep.subr.mxu0 0.0
    %179 = vmatpush1.msra.mxu0 0.0
    %180 = vmatprep.subr.mxu0 0.0
    %181 = vmatpush1.msra.mxu0 0.0
    %182 = vmatprep.subr.mxu0 0.0
    %183 = vmatpush1.msra.mxu0 0.0
    %184 = vmatprep.subr.mxu0 0.0
    %185 = vmatpush1.msra.mxu0 0.0
    %186 = vmatprep.subr.mxu0 0.0
    %187 = vmatpush1.msra.mxu0 0.0
    %188 = vmatprep.subr.mxu0 0.0
    %189 = vmatpush1.msra.mxu0 0.0
    %190 = vmatprep.subr.mxu0 0.0
    %191 = vmatpush1.msra.mxu0 0.0
    %192 = vmatprep.subr.mxu0 0.0
    %193 = vmatpush1.msra.mxu0 0.0
    %194 = vmatprep.mubr.f32.mxu0 0.0
    %195 = vmatmul.mubr.f32.gmra.mrb[0].mxu0 %v124
    %v196 = vpop.f32.mrb[0].mxu0
    %v197 = vadd.f32 %v120, %v196
    %v198 = vpop.f32.mrb[0].mxu0
    %199 = vdwg.mxu0
    %vm200 = vcmask 64512
    %201 = vst.msk [vmem:[#allocation2] sm:$0xff] %vm200, %v197
    // Predicated region
    $region22: #{tpu_custom_call.1} parent=1 // pred_check
      _
    $region23: #{tpu_custom_call.1} parent=1 // pred_check_branch
      %203 = sbr.rel (0) target = $region25
    $region24: #{tpu_custom_call.1} parent=1 // pred_region
      %s205 = ssub.s32 128, 128
      %206 = vsyncadd [#allocation3], %s205
      %s208 = sshll.u32 [#allocation2], 4
      %s209 = int_to_ptr.vmem [resolvable:$true] %s208
      %211 = dma.vmem_to_hbm [thread:$0]  %s209, 128, %s5, [#allocation3]
    $region25: #{tpu_custom_call.1} parent=1 // pred_fallthru
      _
    // Predicated region
    $region26: #{tpu_custom_call.1} parent=1 // pred_check
      _
    $region27: #{tpu_custom_call.1} parent=1 // pred_check_branch
      %213 = sbr.rel (0) target = $region29
    $region28: #{tpu_custom_call.1} parent=1 // pred_region
      %214 = dma.done [#allocation3], 128
    $region29: #{tpu_custom_call.1} parent=1 // pred_fallthru
      _
    %215 = vsyncpa [#allocation3], 1

</llo_original>
